<compile_context>
chip_gen: v5e
topology: v5e:2x2
jax: 0.10.0
libtpu: 0.0.40
codegen_flags: <defaults>
</compile_context>

<pallas_src>
import jax
import jax.numpy as jnp
from jax.experimental import pallas as pl
from jax.experimental.pallas import tpu as pltpu

IN_DIM = 100
H1_DIM = 80
H2_DIM = 30
OUT_DIM = 3
PAD = 128                 # lane-aligned padded width for hidden dims
DEFAULT_TILE_B = 4096     # v5e-safe default; v6e can pass tile_b=8192


def _round_up(n, m):
    return ((n + m - 1) // m) * m


def _mlp_kernel(x_ref, w1_ref, b1_ref, w2_ref, b2_ref, w3_ref, b3_ref, o_ref):
    cdt = w1_ref.dtype                       # compute dtype (bf16)

    # x arrives in native f32; cast to bf16 just before the MXU (cheap VPU op,
    # hidden under DMA/MXU).  relu + re-cast fused so only one activation copy
    # is live across the next matmul.
    x = x_ref[...].astype(cdt)
    h1 = jnp.maximum(
        jnp.dot(x, w1_ref[...], preferred_element_type=jnp.float32) + b1_ref[...],
        0.0).astype(cdt)
    h2 = jnp.maximum(
        jnp.dot(h1, w2_ref[...], preferred_element_type=jnp.float32) + b2_ref[...],
        0.0).astype(cdt)

    # fc3 logits in f32; padded columns of W3 / lanes of b3 are exactly zero,
    # but they are sliced away below so they never enter the softmax.
    logits = jnp.dot(h2, w3_ref[...], preferred_element_type=jnp.float32) + b3_ref[...]

    # Transpose to a lane-dense (3, tb) slab (XLU transpose — free slot here),
    # then run the numerically-stable log_softmax over the 3 real class rows
    # only (≈40x less EUP exp work than over 128 padded lanes).
    lt = jnp.transpose(logits)[:OUT_DIM, :]                     # (3, tb) f32
    m = jnp.max(lt, axis=0, keepdims=True)                      # (1, tb)
    shifted = lt - m
    lse = jnp.log(jnp.sum(jnp.exp(shifted), axis=0, keepdims=True))
    o_ref[...] = (shifted - lse).astype(o_ref.dtype)            # (3, tb) store


def prepare_params(params, compute_dtype=jnp.bfloat16):
    """One-time padding + bf16 cast of the weights (hoisted out of the call path).

    Weights are stored [in, out] (transposed vs. PyTorch's [out, in]).
    All padding is zero; biases stay f32.
    """
    w1, b1, w2, b2, w3, b3 = params
    w1p = jnp.pad(w1, ((0, 0), (0, PAD - H1_DIM))).astype(compute_dtype)              # (100, 128)
    w2p = jnp.pad(w2, ((0, PAD - H1_DIM), (0, PAD - H2_DIM))).astype(compute_dtype)   # (128, 128)
    w3p = jnp.pad(w3, ((0, PAD - H2_DIM), (0, PAD - OUT_DIM))).astype(compute_dtype)  # (128, 128)
    b1p = jnp.pad(b1, ((0, 0), (0, PAD - H1_DIM)))                                    # f32 (1, 128)
    b2p = jnp.pad(b2, ((0, 0), (0, PAD - H2_DIM)))                                    # f32 (1, 128)
    b3p = jnp.pad(b3, ((0, 0), (0, PAD - OUT_DIM)))                                   # f32 (1, 128)
    return w1p, b1p, w2p, b2p, w3p, b3p


def wizard_net_forward(x, prepped_params, tile_b=DEFAULT_TILE_B):
    """x: [B, 100] float32 -> [B, 3] float32 log-probabilities."""
    B, F = x.shape
    assert F == IN_DIM
    w1p, b1p, w2p, b2p, w3p, b3p = prepped_params

    # Batch tile: multiple of 256 (clean 128-lane transposed output blocks and
    # clean in-kernel transposes); ragged last tile handled by Pallas masking.
    tb = min(_round_up(tile_b, 256), _round_up(B, 256))
    grid = (pl.cdiv(B, tb),)
    const = lambda i: (0, 0)   # weights / biases: resident in VMEM across steps

    cost = pl.CostEstimate(
        flops=2 * B * (IN_DIM * PAD + PAD * PAD + PAD * PAD),
        transcendentals=B * (OUT_DIM + 1),                    # exp rows + log
        bytes_accessed=(B * IN_DIM * 4                        # f32 x read
                        + OUT_DIM * B * 4                     # f32 (3, B) write
                        + (IN_DIM * PAD + 2 * PAD * PAD) * 2  # bf16 weights
                        + 3 * PAD * 4),                       # f32 biases
    )

    out_t = pl.pallas_call(
        _mlp_kernel,
        out_shape=jax.ShapeDtypeStruct((OUT_DIM, B), jnp.float32),
        grid=grid,
        in_specs=[
            pl.BlockSpec((tb, IN_DIM), lambda i: (i, 0)),   # x: tiled over batch, f32
            pl.BlockSpec((IN_DIM, PAD), const),             # W1 (bf16)
            pl.BlockSpec((1, PAD), const),                  # b1 (f32)
            pl.BlockSpec((PAD, PAD), const),                # W2 (bf16)
            pl.BlockSpec((1, PAD), const),                  # b2 (f32)
            pl.BlockSpec((PAD, PAD), const),                # W3 (bf16)
            pl.BlockSpec((1, PAD), const),                  # b3 (f32)
        ],
        # Lane-dense transposed output: each step stores 3 contiguous tb-wide rows.
        out_specs=pl.BlockSpec((OUT_DIM, tb), lambda i: (0, i)),
        compiler_params=pltpu.CompilerParams(
            dimension_semantics=("parallel",),
            vmem_limit_bytes=48 * 1024 * 1024),
        cost_estimate=cost,
    )(x, w1p, b1p, w2p, b2p, w3p, b3p)

    # Tiny (3, B) -> (B, 3) transpose in the wrapper (12 B/row, negligible).
    return out_t.T


def init_params(key):
    """PyTorch nn.Linear-style init (U[-1/sqrt(in), 1/sqrt(in)]).
    Weights stored as [in, out] (transposed vs. PyTorch's [out, in])."""
    dims = [(IN_DIM, H1_DIM), (H1_DIM, H2_DIM), (H2_DIM, OUT_DIM)]
    params = []
    for i, (d_in, d_out) in enumerate(dims):
        kw, kb = jax.random.split(jax.random.fold_in(key, i))
        bound = 1.0 / jnp.sqrt(jnp.float32(d_in))
        w = jax.random.uniform(kw, (d_in, d_out), jnp.float32, -bound, bound)
        b = jax.random.uniform(kb, (1, d_out), jnp.float32, -bound, bound)
        params += [w, b]
    return tuple(params)


def reference_forward(x, params, compute_dtype=jnp.bfloat16):
    """Pure-JAX reference mirroring the kernel's bf16-operand / f32-accumulate math.

    Note: matmul operands are bf16 (as in the kernel), so log-probs match a
    full-f32 PyTorch reference only to ~1e-2.
    """
    w1, b1, w2, b2, w3, b3 = params
    xc = x.astype(compute_dtype)
    h1 = jnp.maximum(
        jnp.dot(xc, w1.astype(compute_dtype), preferred_element_type=jnp.float32) + b1, 0.0)
    h2 = jnp.maximum(
        jnp.dot(h1.astype(compute_dtype), w2.astype(compute_dtype),
                preferred_element_type=jnp.float32) + b2, 0.0)
    logits = jnp.dot(h2.astype(compute_dtype), w3.astype(compute_dtype),
                     preferred_element_type=jnp.float32) + b3
    return jax.nn.log_softmax(logits, axis=1)


if __name__ == "__main__":
    key = jax.random.PRNGKey(0)
    kx, kp = jax.random.split(key)

    B = 8  # small batch (at this size the call is launch-overhead bound)
    x = jax.random.normal(kx, (B, IN_DIM), jnp.float32)
    params = init_params(kp)
    prepped = prepare_params(params)   # pad + bf16 cast once, at init

    fwd = jax.jit(wizard_net_forward)
    out = jax.block_until_ready(fwd(x, prepped))
    ref = reference_forward(x, params)

    assert out.shape == (B, OUT_DIM)
    assert bool(jnp.all(jnp.isfinite(out)))
    assert jnp.allclose(out, ref, atol=1e-2, rtol=1e-2)

    print("KERNEL_OK")
</pallas_src>

<mosaic_0001>
module attributes {stable_mosaic.version = 11 : i64} {
  func.func @_mlp_kernel(%arg0: i32, %arg1: memref<256x100xf32, #tpu.memory_space<vmem>>, %arg2: memref<100x128xbf16, #tpu.memory_space<vmem>>, %arg3: memref<1x128xf32, #tpu.memory_space<vmem>>, %arg4: memref<128x128xbf16, #tpu.memory_space<vmem>>, %arg5: memref<1x128xf32, #tpu.memory_space<vmem>>, %arg6: memref<128x128xbf16, #tpu.memory_space<vmem>>, %arg7: memref<1x128xf32, #tpu.memory_space<vmem>>, %arg8: memref<3x256xf32, #tpu.memory_space<vmem>>) attributes {dimension_semantics = [#tpu.dimension_semantics<parallel>], iteration_bounds = array<i64: 1>, scalar_prefetch = 0 : i64, scratch_operands = 0 : i64, tpu.core_type = #tpu.core_type<tc>, window_params = [{transform_indices = @transform_0, window_bounds = array<i64: 256, 100>}, {pipeline_mode = #tpu.pipeline_mode<synchronous>, transform_indices = @transform_1, window_bounds = array<i64: 100, 128>}, {pipeline_mode = #tpu.pipeline_mode<synchronous>, transform_indices = @transform_2, window_bounds = array<i64: 1, 128>}, {pipeline_mode = #tpu.pipeline_mode<synchronous>, transform_indices = @transform_3, window_bounds = array<i64: 128, 128>}, {pipeline_mode = #tpu.pipeline_mode<synchronous>, transform_indices = @transform_4, window_bounds = array<i64: 1, 128>}, {pipeline_mode = #tpu.pipeline_mode<synchronous>, transform_indices = @transform_5, window_bounds = array<i64: 128, 128>}, {pipeline_mode = #tpu.pipeline_mode<synchronous>, transform_indices = @transform_6, window_bounds = array<i64: 1, 128>}, {transform_indices = @transform_7, window_bounds = array<i64: 3, 256>}]} {
    %c0 = arith.constant 0 : index
    %c0_0 = arith.constant 0 : index
    %0 = vector.load %arg1[%c0, %c0_0] : memref<256x100xf32, #tpu.memory_space<vmem>>, vector<256x100xf32>
    %1 = arith.truncf %0 : vector<256x100xf32> to vector<256x100xbf16>
    %c0_1 = arith.constant 0 : index
    %c0_2 = arith.constant 0 : index
    %2 = vector.load %arg2[%c0_1, %c0_2] : memref<100x128xbf16, #tpu.memory_space<vmem>>, vector<100x128xbf16>
    %cst = arith.constant dense<0.000000e+00> : vector<256x128xf32>
    %3 = tpu.matmul %1, %2, %cst {dimension_numbers = #tpu.dot_dimension_numbers<[1], [0], [0], [1], [0, 0, 1, 1], [], []>} : vector<256x100xbf16>, vector<100x128xbf16>, vector<256x128xf32> -> vector<256x128xf32>
    %c0_3 = arith.constant 0 : index
    %c0_4 = arith.constant 0 : index
    %4 = vector.load %arg3[%c0_3, %c0_4] : memref<1x128xf32, #tpu.memory_space<vmem>>, vector<1x128xf32>
    %5 = vector.broadcast %4 : vector<1x128xf32> to vector<256x128xf32>
    %6 = arith.addf %3, %5 : vector<256x128xf32>
    %cst_5 = arith.constant 0.000000e+00 : f32
    %7 = vector.broadcast %cst_5 : f32 to vector<256x128xf32>
    %8 = arith.maximumf %6, %7 : vector<256x128xf32>
    %9 = arith.truncf %8 : vector<256x128xf32> to vector<256x128xbf16>
    %c0_6 = arith.constant 0 : index
    %c0_7 = arith.constant 0 : index
    %10 = vector.load %arg4[%c0_6, %c0_7] : memref<128x128xbf16, #tpu.memory_space<vmem>>, vector<128x128xbf16>
    %cst_8 = arith.constant dense<0.000000e+00> : vector<256x128xf32>
    %11 = tpu.matmul %9, %10, %cst_8 {dimension_numbers = #tpu.dot_dimension_numbers<[1], [0], [0], [1], [0, 0, 1, 1], [], []>} : vector<256x128xbf16>, vector<128x128xbf16>, vector<256x128xf32> -> vector<256x128xf32>
    %c0_9 = arith.constant 0 : index
    %c0_10 = arith.constant 0 : index
    %12 = vector.load %arg5[%c0_9, %c0_10] : memref<1x128xf32, #tpu.memory_space<vmem>>, vector<1x128xf32>
    %13 = vector.broadcast %12 : vector<1x128xf32> to vector<256x128xf32>
    %14 = arith.addf %11, %13 : vector<256x128xf32>
    %cst_11 = arith.constant 0.000000e+00 : f32
    %15 = vector.broadcast %cst_11 : f32 to vector<256x128xf32>
    %16 = arith.maximumf %14, %15 : vector<256x128xf32>
    %17 = arith.truncf %16 : vector<256x128xf32> to vector<256x128xbf16>
    %c0_12 = arith.constant 0 : index
    %c0_13 = arith.constant 0 : index
    %18 = vector.load %arg6[%c0_12, %c0_13] : memref<128x128xbf16, #tpu.memory_space<vmem>>, vector<128x128xbf16>
    %cst_14 = arith.constant dense<0.000000e+00> : vector<256x128xf32>
    %19 = tpu.matmul %17, %18, %cst_14 {dimension_numbers = #tpu.dot_dimension_numbers<[1], [0], [0], [1], [0, 0, 1, 1], [], []>} : vector<256x128xbf16>, vector<128x128xbf16>, vector<256x128xf32> -> vector<256x128xf32>
    %c0_15 = arith.constant 0 : index
    %c0_16 = arith.constant 0 : index
    %20 = vector.load %arg7[%c0_15, %c0_16] : memref<1x128xf32, #tpu.memory_space<vmem>>, vector<1x128xf32>
    %21 = vector.broadcast %20 : vector<1x128xf32> to vector<256x128xf32>
    %22 = arith.addf %19, %21 : vector<256x128xf32>
    %23 = tpu.transpose %22, [1, 0] : vector<256x128xf32> -> vector<128x256xf32>
    %24 = vector.extract_strided_slice %23 {offsets = [0, 0], sizes = [3, 256], strides = [1, 1]} : vector<128x256xf32> to vector<3x256xf32>
    %cst_17 = arith.constant dense<0xFF800000> : vector<256xf32>
    %25 = vector.multi_reduction <maximumf>, %24, %cst_17 [0] : vector<3x256xf32> to vector<256xf32>
    %26 = vector.shape_cast %25 : vector<256xf32> to vector<1x256xf32>
    %27 = vector.broadcast %26 : vector<1x256xf32> to vector<3x256xf32>
    %28 = arith.subf %24, %27 : vector<3x256xf32>
    %29 = math.exp %28 : vector<3x256xf32>
    %cst_18 = arith.constant dense<0.000000e+00> : vector<256xf32>
    %30 = vector.multi_reduction <add>, %29, %cst_18 [0] : vector<3x256xf32> to vector<256xf32>
    %31 = vector.shape_cast %30 : vector<256xf32> to vector<1x256xf32>
    %32 = math.log %31 : vector<1x256xf32>
    %33 = vector.broadcast %32 : vector<1x256xf32> to vector<3x256xf32>
    %34 = arith.subf %28, %33 : vector<3x256xf32>
    %c0_19 = arith.constant 0 : index
    %c0_20 = arith.constant 0 : index
    %35 = vector.load %arg8[%c0_19, %c0_20] : memref<3x256xf32, #tpu.memory_space<vmem>>, vector<3x256xf32>
    tpu.vector_store %arg8[%c0_19, %c0_20], %34 {strides = array<i32>} : memref<3x256xf32, #tpu.memory_space<vmem>>, vector<3x256xf32>,
    return
  }
  func.func @transform_0(%arg0: i32) -> (i32, i32) {
    %c0_i32 = arith.constant 0 : i32
    %c0_i32_0 = arith.constant 0 : i32
    return %arg0, %c0_i32 : i32, i32
  }
  func.func @transform_1(%arg0: i32) -> (i32, i32) {
    %c0_i32 = arith.constant 0 : i32
    %c0_i32_0 = arith.constant 0 : i32
    %c0_i32_1 = arith.constant 0 : i32
    return %c0_i32, %c0_i32_0 : i32, i32
  }
  func.func @transform_2(%arg0: i32) -> (i32, i32) {
    %c0_i32 = arith.constant 0 : i32
    %c0_i32_0 = arith.constant 0 : i32
    %c0_i32_1 = arith.constant 0 : i32
    return %c0_i32, %c0_i32_0 : i32, i32
  }
  func.func @transform_3(%arg0: i32) -> (i32, i32) {
    %c0_i32 = arith.constant 0 : i32
    %c0_i32_0 = arith.constant 0 : i32
    %c0_i32_1 = arith.constant 0 : i32
    return %c0_i32, %c0_i32_0 : i32, i32
  }
  func.func @transform_4(%arg0: i32) -> (i32, i32) {
    %c0_i32 = arith.constant 0 : i32
    %c0_i32_0 = arith.constant 0 : i32
    %c0_i32_1 = arith.constant 0 : i32
    return %c0_i32, %c0_i32_0 : i32, i32
  }
  func.func @transform_5(%arg0: i32) -> (i32, i32) {
    %c0_i32 = arith.constant 0 : i32
    %c0_i32_0 = arith.constant 0 : i32
    %c0_i32_1 = arith.constant 0 : i32
    return %c0_i32, %c0_i32_0 : i32, i32
  }
  func.func @transform_6(%arg0: i32) -> (i32, i32) {
    %c0_i32 = arith.constant 0 : i32
    %c0_i32_0 = arith.constant 0 : i32
    %c0_i32_1 = arith.constant 0 : i32
    return %c0_i32, %c0_i32_0 : i32, i32
  }
  func.func @transform_7(%arg0: i32) -> (i32, i32) {
    %c0_i32 = arith.constant 0 : i32
    %c0_i32_0 = arith.constant 0 : i32
    return %c0_i32, %arg0 : i32, i32
  }
}

</mosaic_0001>

<llo_original>
// kernel: wizard_net_forward.1
$region0: #{wizard_net_forward.1}
  #allocation0 [shape = 'u32[]', space=smem, size = 0x4, offset = 0x4, fixed_abs, tag = 'smem constant byte address 0x4 - core index']
  #allocation1 [shape = 'u32[72,128]{1,0:T(1,128)}', space=vmem, size = 0x9000, scoped, tag = 'internal scratch']
  %s0 = inlined_call_operand.hbm [shape: f32[8,100], index: 0, kind: input, shape index: {}]
  %s1 = inlined_call_operand.hbm [shape: bf16[100,128], index: 1, kind: input, shape index: {}]
  %s2 = inlined_call_operand.vmem [shape: f32[1,128], index: 2, kind: input, shape index: {}]
  %s3 = inlined_call_operand.hbm [shape: bf16[128,128], index: 3, kind: input, shape index: {}]
  %s4 = inlined_call_operand.vmem [shape: f32[1,128], index: 4, kind: input, shape index: {}]
  %s5 = inlined_call_operand.hbm [shape: bf16[128,128], index: 5, kind: input, shape index: {}]
  %s6 = inlined_call_operand.vmem [shape: f32[1,128], index: 6, kind: input, shape index: {}]
  %s7 = inlined_call_operand.hbm [shape: f32[3,8], index: 7, kind: output, shape index: {}]
  %s8 = sld [smem:[#allocation0]]
  $region54: #{wizard_net_forward.1} parent=0
    _
  %s10 = ssub.s32 1, %s8
  %s11 = scalar_select 0, %s10, %s8
  $region1: #{wizard_net_forward.1} parent=0
    #allocation2 [shape = 'u8[131072]{0}', space=vmem, size = 0x20000, scoped, tag = 'input window, operand 0, single buffered']
    #allocation3 [shape = 's32[1]{0}', space=sflag, size = 0x4, scoped, tag = 'scoped memory for wizard_net_forward.1']
    #allocation4 [shape = 's32[1]{0}', space=sflag, size = 0x4, scoped, tag = 'scoped memory for wizard_net_forward.1']
    #allocation5 [shape = 'u8[26624]{0}', space=vmem, size = 0x6800, scoped, tag = 'input window, operand 1, single buffered']
    #allocation6 [shape = 's32[1]{0}', space=sflag, size = 0x4, scoped, tag = 'scoped memory for wizard_net_forward.1']
    #allocation7 [shape = 'u8[32768]{0}', space=vmem, size = 0x8000, scoped, tag = 'input window, operand 3, single buffered']
    #allocation8 [shape = 'u8[32768]{0}', space=vmem, size = 0x8000, scoped, tag = 'input window, operand 5, single buffered']
    #allocation9 [shape = 's32[1]{0}', space=sflag, size = 0x4, scoped, tag = 'scoped memory for wizard_net_forward.1']
    #allocation10 [shape = 'u8[4096]{0}', space=vmem, size = 0x1000, scoped, tag = 'output window, operand 0, single buffered']
    %12 = vsyncpa [#allocation3], 0
    %13 = vsyncpa [#allocation6], 0
    %14 = vsyncpa [#allocation9], 0
    %15 = vsyncpa [#allocation4], 0
    // Predicated region
    $region2: #{wizard_net_forward.1} parent=1 // pred_check
      _
    $region3: #{wizard_net_forward.1} parent=1 // pred_check_branch
      %17 = sbr.rel (0) target = $region5
    $region4: #{wizard_net_forward.1} parent=1 // pred_region
      %19 = vsyncadd [#allocation3], 3968
      %s20 = sshll.u32 %s0, 4
      %s21 = int_to_ptr.hbm [resolvable:$true] %s20
      %s22 = sshll.u32 [#allocation2], 4
      %s23 = int_to_ptr.vmem [resolvable:$true] %s22
      %28 = dma.hbm_to_vmem [thread:$0]  %s21, 128, %s23, [#allocation3], 128, 128, 8
    $region5: #{wizard_net_forward.1} parent=1 // pred_fallthru
      _
    // Predicated region
    $region6: #{wizard_net_forward.1} parent=1 // pred_check
      _
    $region7: #{wizard_net_forward.1} parent=1 // pred_check_branch
      %30 = sbr.rel (0) target = $region9
    $region8: #{wizard_net_forward.1} parent=1 // pred_region
      %32 = vsyncadd [#allocation6], 0
      %s33 = sshll.u32 %s1, 4
      %s34 = int_to_ptr.hbm [resolvable:$true] %s33
      %s35 = sshll.u32 [#allocation5], 4
      %s36 = int_to_ptr.vmem [resolvable:$true] %s35
      %41 = dma.hbm_to_vmem [thread:$0]  %s34, 832, %s36, [#allocation6], 64, 64, 4
    $region9: #{wizard_net_forward.1} parent=1 // pred_fallthru
      _
    // Predicated region
    $region10: #{wizard_net_forward.1} parent=1 // pred_check
      _
    $region11: #{wizard_net_forward.1} parent=1 // pred_check_branch
      %43 = sbr.rel (0) target = $region13
    $region12: #{wizard_net_forward.1} parent=1 // pred_region
      _
    $region13: #{wizard_net_forward.1} parent=1 // pred_fallthru
      _
    // Predicated region
    $region14: #{wizard_net_forward.1} parent=1 // pred_check
      _
    $region15: #{wizard_net_forward.1} parent=1 // pred_check_branch
      %45 = sbr.rel (0) target = $region17
    $region16: #{wizard_net_forward.1} parent=1 // pred_region
      %47 = vsyncadd [#allocation6], 0
      %s48 = sshll.u32 %s3, 4
      %s49 = int_to_ptr.hbm [resolvable:$true] %s48
      %s50 = sshll.u32 [#allocation7], 4
      %s51 = int_to_ptr.vmem [resolvable:$true] %s50
      %56 = dma.hbm_to_vmem [thread:$0]  %s49, 1024, %s51, [#allocation6], 64, 64, 4
    $region17: #{wizard_net_forward.1} parent=1 // pred_fallthru
      _
    // Predicated region
    $region18: #{wizard_net_forward.1} parent=1 // pred_check
      _
    $region19: #{wizard_net_forward.1} parent=1 // pred_check_branch
      %58 = sbr.rel (0) target = $region21
    $region20: #{wizard_net_forward.1} parent=1 // pred_region
      _
    $region21: #{wizard_net_forward.1} parent=1 // pred_fallthru
      _
    // Predicated region
    $region22: #{wizard_net_forward.1} parent=1 // pred_check
      _
    $region23: #{wizard_net_forward.1} parent=1 // pred_check_branch
      %60 = sbr.rel (0) target = $region25
    $region24: #{wizard_net_forward.1} parent=1 // pred_region
      %62 = vsyncadd [#allocation9], 0
      %s63 = sshll.u32 %s5, 4
      %s64 = int_to_ptr.hbm [resolvable:$true] %s63
      %s65 = sshll.u32 [#allocation8], 4
      %s66 = int_to_ptr.vmem [resolvable:$true] %s65
      %71 = dma.hbm_to_vmem [thread:$0]  %s64, 1024, %s66, [#allocation9], 64, 64, 4
    $region25: #{wizard_net_forward.1} parent=1 // pred_fallthru
      _
    // Predicated region
    $region26: #{wizard_net_forward.1} parent=1 // pred_check
      _
    $region27: #{wizard_net_forward.1} parent=1 // pred_check_branch
      %73 = sbr.rel (0) target = $region29
    $region28: #{wizard_net_forward.1} parent=1 // pred_region
      _
    $region29: #{wizard_net_forward.1} parent=1 // pred_fallthru
      _
    // Predicated region
    $region30: #{wizard_net_forward.1} parent=1 // pred_check
      _
    $region31: #{wizard_net_forward.1} parent=1 // pred_check_branch
      %75 = sbr.rel (0) target = $region33
    $region32: #{wizard_net_forward.1} parent=1 // pred_region
      %77 = dma.done [#allocation3], 4096
    $region33: #{wizard_net_forward.1} parent=1 // pred_fallthru
      _
    // Predicated region
    $region34: #{wizard_net_forward.1} parent=1 // pred_check
      _
    $region35: #{wizard_net_forward.1} parent=1 // pred_check_branch
      %79 = sbr.rel (0) target = $region37
    $region36: #{wizard_net_forward.1} parent=1 // pred_region
      %81 = dma.done [#allocation6], 832
    $region37: #{wizard_net_forward.1} parent=1 // pred_fallthru
      _
    // Predicated region
    $region38: #{wizard_net_forward.1} parent=1 // pred_check
      _
    $region39: #{wizard_net_forward.1} parent=1 // pred_check_branch
      %83 = sbr.rel (0) target = $region41
    $region40: #{wizard_net_forward.1} parent=1 // pred_region
      %85 = dma.done [#allocation6], 1024
    $region41: #{wizard_net_forward.1} parent=1 // pred_fallthru
      _
    // Predicated region
    $region42: #{wizard_net_forward.1} parent=1 // pred_check
      _
    $region43: #{wizard_net_forward.1} parent=1 // pred_check_branch
      %87 = sbr.rel (0) target = $region45
    $region44: #{wizard_net_forward.1} parent=1 // pred_region
      %89 = dma.done [#allocation9], 1024
    $region45: #{wizard_net_forward.1} parent=1 // pred_fallthru
      _
    %v91 = vld [vmem:[#allocation2] sm:$0xff]
    %v92 = vld [vmem:[#allocation2 + $0x8] sm:$0xff]
    %v93 = vld [vmem:[#allocation2 + $0x10] sm:$0xff]
    %v94 = vld [vmem:[#allocation2 + $0x18] sm:$0xff]
    %v95 = vld [vmem:[#allocation2 + $0x20] sm:$0xff]
    %v96 = vld [vmem:[#allocation2 + $0x28] sm:$0xff]
    %v97 = vld [vmem:[#allocation2 + $0x30] sm:$0xff]
    %v98 = vld [vmem:[#allocation2 + $0x38] sm:$0xff]
    %v99 = vld [vmem:[#allocation2 + $0x40] sm:$0xff]
    %v100 = vld [vmem:[#allocation2 + $0x48] sm:$0xff]
    %v101 = vld [vmem:[#allocation2 + $0x50] sm:$0xff]
    %v102 = vld [vmem:[#allocation2 + $0x58] sm:$0xff]
    %v103 = vld [vmem:[#allocation2 + $0x60] sm:$0xff]
    %v104 = vld [vmem:[#allocation2 + $0x68] sm:$0xff]
    %v105 = vld [vmem:[#allocation2 + $0x70] sm:$0xff]
    %v106 = vld [vmem:[#allocation2 + $0x78] sm:$0xff]
    %v107 = vld [vmem:[#allocation2 + $0x80] sm:$0xff]
    %v108 = vld [vmem:[#allocation2 + $0x88] sm:$0xff]
    %v109 = vld [vmem:[#allocation2 + $0x90] sm:$0xff]
    %v110 = vld [vmem:[#allocation2 + $0x98] sm:$0xff]
    %v111 = vld [vmem:[#allocation2 + $0xa0] sm:$0xff]
    %v112 = vld [vmem:[#allocation2 + $0xa8] sm:$0xff]
    %v113 = vld [vmem:[#allocation2 + $0xb0] sm:$0xff]
    %v114 = vld [vmem:[#allocation2 + $0xb8] sm:$0xff]
    %v115 = vld [vmem:[#allocation2 + $0xc0] sm:$0xff]
    %v116 = vld [vmem:[#allocation2 + $0xc8] sm:$0xff]
    %v117 = vld [vmem:[#allocation2 + $0xd0] sm:$0xff]
    %v118 = vld [vmem:[#allocation2 + $0xd8] sm:$0xff]
    %v119 = vld [vmem:[#allocation2 + $0xe0] sm:$0xff]
    %v120 = vld [vmem:[#allocation2 + $0xe8] sm:$0xff]
    %v121 = vld [vmem:[#allocation2 + $0xf0] sm:$0xff]
    %v122 = vld [vmem:[#allocation2 + $0xf8] sm:$0xff]
    %v123 = vpack.c.bf16 %v92, %v91
    %v124 = vpack.c.bf16 %v94, %v93
    %v125 = vpack.c.bf16 %v96, %v95
    %v126 = vpack.c.bf16 %v98, %v97
    %v127 = vpack.c.bf16 %v100, %v99
    %v128 = vpack.c.bf16 %v102, %v101
    %v129 = vpack.c.bf16 %v104, %v103
    %v130 = vpack.c.bf16 %v106, %v105
    %v131 = vpack.c.bf16 %v108, %v107
    %v132 = vpack.c.bf16 %v110, %v109
    %v133 = vpack.c.bf16 %v112, %v111
    %v134 = vpack.c.bf16 %v114, %v113
    %v135 = vpack.c.bf16 %v116, %v115
    %v136 = vpack.c.bf16 %v118, %v117
    %v137 = vpack.c.bf16 %v120, %v119
    %v138 = vpack.c.bf16 %v122, %v121
    %v139 = vld [vmem:[#allocation5] sm:$0xf]
    %v140 = vld [vmem:[#allocation5 + $0x4] sm:$0xf]
    %v141 = vld [vmem:[#allocation5 + $0x8] sm:$0xf]
    %v142 = vld [vmem:[#allocation5 + $0xc] sm:$0xf]
    %v143 = vld [vmem:[#allocation5 + $0x10] sm:$0xf]
    %v144 = vld [vmem:[#allocation5 + $0x14] sm:$0xf]
    %v145 = vld [vmem:[#allocation5 + $0x18] sm:$0xf]
    %v146 = vld [vmem:[#allocation5 + $0x1c] sm:$0xf]
    %v147 = vld [vmem:[#allocation5 + $0x20] sm:$0xf]
    %v148 = vld [vmem:[#allocation5 + $0x24] sm:$0xf]
    %v149 = vld [vmem:[#allocation5 + $0x28] sm:$0xf]
    %v150 = vld [vmem:[#allocation5 + $0x2c] sm:$0xf]
    %v151 = vld [vmem:[#allocation5 + $0x30] sm:$0x3]
    %v152 = vld [vmem:[%s2] sm:$0x1]
    %v154 = vperm.slane %v152, 0
    %v169 = vunpack.c.l.b16 %v139
    %v170 = vunpack.c.l.b16 %v140
    %v171 = vunpack.c.l.b16 %v141
    %v172 = vunpack.c.l.b16 %v142
    %v173 = vunpack.c.l.b16 %v143
    %v174 = vunpack.c.l.b16 %v144
    %v175 = vunpack.c.l.b16 %v145
    %v176 = vunpack.c.l.b16 %v146
    %v177 = vunpack.c.l.b16 %v147
    %v178 = vunpack.c.l.b16 %v148
    %v179 = vunpack.c.l.b16 %v149
    %v180 = vunpack.c.l.b16 %v150
    %v181 = vunpack.c.l.b16 %v151
    %v182 = vpack.c.b16 %v170, %v169
    %v183 = vpack.c.b16 %v172, %v171
    %v184 = vpack.c.b16 %v174, %v173
    %v185 = vpack.c.b16 %v176, %v175
    %v186 = vpack.c.b16 %v178, %v177
    %v187 = vpack.c.b16 %v180, %v179
    %v188 = vpack.c.b16 %v181, %v181
    %vm195 = vcmask 818176
    %v197 = vsel %vm195, %v123, 0
    %v200 = vsel %vm195, %v124, 0
    %v203 = vsel %vm195, %v125, 0
    %v206 = vsel %vm195, %v126, 0
    %v209 = vsel %vm195, %v127, 0
    %v212 = vsel %vm195, %v128, 0
    %v215 = vsel %vm195, %v129, 0
    %v218 = vsel %vm195, %v130, 0
    %v221 = vsel %vm195, %v131, 0
    %v224 = vsel %vm195, %v132, 0
    %v227 = vsel %vm195, %v133, 0
    %v230 = vsel %vm195, %v134, 0
    %v233 = vsel %vm195, %v135, 0
    %v236 = vsel %vm195, %v136, 0
    %v239 = vsel %vm195, %v137, 0
    %v242 = vsel %vm195, %v138, 0
    %vm244 = vcmask 1041408
    %v246 = vsel %vm244, %v188, 0
    %248 = vmatpush.bf16.msra.mxu0 0
    %249 = vmatpush.bf16.msra.mxu0 %v246
    %250 = vmatpush.bf16.msra.mxu0 %v187
    %251 = vmatpush.bf16.msra.mxu0 %v186
    %252 = vmatpush.bf16.msra.mxu0 %v185
    %253 = vmatpush.bf16.msra.mxu0 %v184
    %254 = vmatpush.bf16.msra.mxu0 %v183
    %255 = vmatpush.bf16.msra.mxu0 %v182
    %256 = vmatmul.bf16.gmra.mxu0 %v197
    %v257 = vpop.f32.mrf.mxu0
    %v258 = vadd.f32 %v154, %v257
    %v259 = vpop.f32.mrf.mxu0
    %v260 = vadd.f32 %v154, %v259
    %261 = vmatmul.bf16.gmra.mxu0 %v200
    %v262 = vpop.f32.mrf.mxu0
    %v263 = vadd.f32 %v154, %v262
    %v264 = vpop.f32.mrf.mxu0
    %v265 = vadd.f32 %v154, %v264
    %266 = vmatmul.bf16.gmra.mxu0 %v203
    %v267 = vpop.f32.mrf.mxu0
    %v268 = vadd.f32 %v154, %v267
    %v269 = vpop.f32.mrf.mxu0
    %v270 = vadd.f32 %v154, %v269
    %271 = vmatmul.bf16.gmra.mxu0 %v206
    %v272 = vpop.f32.mrf.mxu0
    %v273 = vadd.f32 %v154, %v272
    %v274 = vpop.f32.mrf.mxu0
    %v275 = vadd.f32 %v154, %v274
    %276 = vmatmul.bf16.gmra.mxu0 %v209
    %v277 = vpop.f32.mrf.mxu0
    %v278 = vadd.f32 %v154, %v277
    %v279 = vpop.f32.mrf.mxu0
    %v280 = vadd.f32 %v154, %v279
    %281 = vmatmul.bf16.gmra.mxu0 %v212
    %v282 = vpop.f32.mrf.mxu0
    %v283 = vadd.f32 %v154, %v282
    %v284 = vpop.f32.mrf.mxu0
    %v285 = vadd.f32 %v154, %v284
    %286 = vmatmul.bf16.gmra.mxu0 %v215
    %v287 = vpop.f32.mrf.mxu0
    %v288 = vadd.f32 %v154, %v287
    %v289 = vpop.f32.mrf.mxu0
    %v290 = vadd.f32 %v154, %v289
    %291 = vmatmul.bf16.gmra.mxu0 %v218
    %v292 = vpop.f32.mrf.mxu0
    %v293 = vadd.f32 %v154, %v292
    %v294 = vpop.f32.mrf.mxu0
    %v295 = vadd.f32 %v154, %v294
    %296 = vmatmul.bf16.gmra.mxu0 %v221
    %v297 = vpop.f32.mrf.mxu0
    %v298 = vadd.f32 %v154, %v297
    %v299 = vpop.f32.mrf.mxu0
    %v300 = vadd.f32 %v154, %v299
    %301 = vmatmul.bf16.gmra.mxu0 %v224
    %v302 = vpop.f32.mrf.mxu0
    %v303 = vadd.f32 %v154, %v302
    %v304 = vpop.f32.mrf.mxu0
    %v305 = vadd.f32 %v154, %v304
    %306 = vmatmul.bf16.gmra.mxu0 %v227
    %v307 = vpop.f32.mrf.mxu0
    %v308 = vadd.f32 %v154, %v307
    %v309 = vpop.f32.mrf.mxu0
    %v310 = vadd.f32 %v154, %v309
    %311 = vmatmul.bf16.gmra.mxu0 %v230
    %v312 = vpop.f32.mrf.mxu0
    %v313 = vadd.f32 %v154, %v312
    %v314 = vpop.f32.mrf.mxu0
    %v315 = vadd.f32 %v154, %v314
    %316 = vmatmul.bf16.gmra.mxu0 %v233
    %v317 = vpop.f32.mrf.mxu0
    %v318 = vadd.f32 %v154, %v317
    %v319 = vpop.f32.mrf.mxu0
    %v320 = vadd.f32 %v154, %v319
    %321 = vmatmul.bf16.gmra.mxu0 %v236
    %v322 = vpop.f32.mrf.mxu0
    %v323 = vadd.f32 %v154, %v322
    %v324 = vpop.f32.mrf.mxu0
    %v325 = vadd.f32 %v154, %v324
    %326 = vmatmul.bf16.gmra.mxu0 %v239
    %v327 = vpop.f32.mrf.mxu0
    %v328 = vadd.f32 %v154, %v327
    %v329 = vpop.f32.mrf.mxu0
    %v330 = vadd.f32 %v154, %v329
    %331 = vmatmul.bf16.gmra.mxu0 %v242
    %v332 = vpop.f32.mrf.mxu0
    %v333 = vadd.f32 %v154, %v332
    %v334 = vpop.f32.mrf.mxu0
    %v335 = vadd.f32 %v154, %v334
    %336 = vdwg.mxu0
    %v337 = vmax.f32 %v258, 0.0
    %v338 = vmax.f32 %v260, 0.0
    %v339 = vmax.f32 %v263, 0.0
    %v340 = vmax.f32 %v265, 0.0
    %v341 = vmax.f32 %v268, 0.0
    %v342 = vmax.f32 %v270, 0.0
    %v343 = vmax.f32 %v273, 0.0
    %v344 = vmax.f32 %v275, 0.0
    %v345 = vmax.f32 %v278, 0.0
    %v346 = vmax.f32 %v280, 0.0
    %v347 = vmax.f32 %v283, 0.0
    %v348 = vmax.f32 %v285, 0.0
    %v349 = vmax.f32 %v288, 0.0
    %v350 = vmax.f32 %v290, 0.0
    %v351 = vmax.f32 %v293, 0.0
    %v352 = vmax.f32 %v295, 0.0
    %v353 = vmax.f32 %v298, 0.0
    %v354 = vmax.f32 %v300, 0.0
    %v355 = vmax.f32 %v303, 0.0
    %v356 = vmax.f32 %v305, 0.0
    %v357 = vmax.f32 %v308, 0.0
    %v358 = vmax.f32 %v310, 0.0
    %v359 = vmax.f32 %v313, 0.0
    %v360 = vmax.f32 %v315, 0.0
    %v361 = vmax.f32 %v318, 0.0
    %v362 = vmax.f32 %v320, 0.0
    %v363 = vmax.f32 %v323, 0.0
    %v364 = vmax.f32 %v325, 0.0
    %v365 = vmax.f32 %v328, 0.0
    %v366 = vmax.f32 %v330, 0.0
    %v367 = vmax.f32 %v333, 0.0
    %v368 = vmax.f32 %v335, 0.0
    %v369 = vpack.c.bf16 %v338, %v337
    %v370 = vpack.c.bf16 %v340, %v339
    %v371 = vpack.c.bf16 %v342, %v341
    %v372 = vpack.c.bf16 %v344, %v343
    %v373 = vpack.c.bf16 %v346, %v345
    %v374 = vpack.c.bf16 %v348, %v347
    %v375 = vpack.c.bf16 %v350, %v349
    %v376 = vpack.c.bf16 %v352, %v351
    %v377 = vpack.c.bf16 %v354, %v353
    %v378 = vpack.c.bf16 %v356, %v355
    %v379 = vpack.c.bf16 %v358, %v357
    %v380 = vpack.c.bf16 %v360, %v359
    %v381 = vpack.c.bf16 %v362, %v361
    %v382 = vpack.c.bf16 %v364, %v363
    %v383 = vpack.c.bf16 %v366, %v365
    %v384 = vpack.c.bf16 %v368, %v367
    %v385 = vld [vmem:[#allocation7] sm:$0xf]
    %v386 = vld [vmem:[#allocation7 + $0x4] sm:$0xf]
    %v387 = vld [vmem:[#allocation7 + $0x8] sm:$0xf]
    %v388 = vld [vmem:[#allocation7 + $0xc] sm:$0xf]
    %v389 = vld [vmem:[#allocation7 + $0x10] sm:$0xf]
    %v390 = vld [vmem:[#allocation7 + $0x14] sm:$0xf]
    %v391 = vld [vmem:[#allocation7 + $0x18] sm:$0xf]
    %v392 = vld [vmem:[#allocation7 + $0x1c] sm:$0xf]
    %v393 = vld [vmem:[#allocation7 + $0x20] sm:$0xf]
    %v394 = vld [vmem:[#allocation7 + $0x24] sm:$0xf]
    %v395 = vld [vmem:[#allocation7 + $0x28] sm:$0xf]
    %v396 = vld [vmem:[#allocation7 + $0x2c] sm:$0xf]
    %v397 = vld [vmem:[#allocation7 + $0x30] sm:$0xf]
    %v398 = vld [vmem:[#allocation7 + $0x34] sm:$0xf]
    %v399 = vld [vmem:[#allocation7 + $0x38] sm:$0xf]
    %v400 = vld [vmem:[#allocation7 + $0x3c] sm:$0xf]
    %v401 = vld [vmem:[%s4] sm:$0x1]
    %v403 = vperm.slane %v401, 0
    %v421 = vunpack.c.l.b16 %v385
    %v422 = vunpack.c.l.b16 %v386
    %v423 = vunpack.c.l.b16 %v387
    %v424 = vunpack.c.l.b16 %v388
    %v425 = vunpack.c.l.b16 %v389
    %v426 = vunpack.c.l.b16 %v390
    %v427 = vunpack.c.l.b16 %v391
    %v428 = vunpack.c.l.b16 %v392
    %v429 = vunpack.c.l.b16 %v393
    %v430 = vunpack.c.l.b16 %v394
    %v431 = vunpack.c.l.b16 %v395
    %v432 = vunpack.c.l.b16 %v396
    %v433 = vunpack.c.l.b16 %v397
    %v434 = vunpack.c.l.b16 %v398
    %v435 = vunpack.c.l.b16 %v399
    %v436 = vunpack.c.l.b16 %v400
    %v437 = vpack.c.b16 %v422, %v421
    %v438 = vpack.c.b16 %v424, %v423
    %v439 = vpack.c.b16 %v426, %v425
    %v440 = vpack.c.b16 %v428, %v427
    %v441 = vpack.c.b16 %v430, %v429
    %v442 = vpack.c.b16 %v432, %v431
    %v443 = vpack.c.b16 %v434, %v433
    %v444 = vpack.c.b16 %v436, %v435
    %453 = vmatpush.bf16.msra.mxu0 %v444
    %454 = vmatpush.bf16.msra.mxu0 %v443
    %455 = vmatpush.bf16.msra.mxu0 %v442
    %456 = vmatpush.bf16.msra.mxu0 %v441
    %457 = vmatpush.bf16.msra.mxu0 %v440
    %458 = vmatpush.bf16.msra.mxu0 %v439
    %459 = vmatpush.bf16.msra.mxu0 %v438
    %460 = vmatpush.bf16.msra.mxu0 %v437
    %461 = vmatmul.bf16.gmra.mxu0 %v369
    %v462 = vpop.f32.mrf.mxu0
    %v463 = vadd.f32 %v403, %v462
    %v464 = vpop.f32.mrf.mxu0
    %v465 = vadd.f32 %v403, %v464
    %466 = vmatmul.bf16.gmra.mxu0 %v370
    %v467 = vpop.f32.mrf.mxu0
    %v468 = vadd.f32 %v403, %v467
    %v469 = vpop.f32.mrf.mxu0
    %v470 = vadd.f32 %v403, %v469
    %471 = vmatmul.bf16.gmra.mxu0 %v371
    %v472 = vpop.f32.mrf.mxu0
    %v473 = vadd.f32 %v403, %v472
    %v474 = vpop.f32.mrf.mxu0
    %v475 = vadd.f32 %v403, %v474
    %476 = vmatmul.bf16.gmra.mxu0 %v372
    %v477 = vpop.f32.mrf.mxu0
    %v478 = vadd.f32 %v403, %v477
    %v479 = vpop.f32.mrf.mxu0
    %v480 = vadd.f32 %v403, %v479
    %481 = vmatmul.bf16.gmra.mxu0 %v373
    %v482 = vpop.f32.mrf.mxu0
    %v483 = vadd.f32 %v403, %v482
    %v484 = vpop.f32.mrf.mxu0
    %v485 = vadd.f32 %v403, %v484
    %486 = vmatmul.bf16.gmra.mxu0 %v374
    %v487 = vpop.f32.mrf.mxu0
    %v488 = vadd.f32 %v403, %v487
    %v489 = vpop.f32.mrf.mxu0
    %v490 = vadd.f32 %v403, %v489
    %491 = vmatmul.bf16.gmra.mxu0 %v375
    %v492 = vpop.f32.mrf.mxu0
    %v493 = vadd.f32 %v403, %v492
    %v494 = vpop.f32.mrf.mxu0
    %v495 = vadd.f32 %v403, %v494
    %496 = vmatmul.bf16.gmra.mxu0 %v376
    %v497 = vpop.f32.mrf.mxu0
    %v498 = vadd.f32 %v403, %v497
    %v499 = vpop.f32.mrf.mxu0
    %v500 = vadd.f32 %v403, %v499
    %501 = vmatmul.bf16.gmra.mxu0 %v377
    %v502 = vpop.f32.mrf.mxu0
    %v503 = vadd.f32 %v403, %v502
    %v504 = vpop.f32.mrf.mxu0
    %v505 = vadd.f32 %v403, %v504
    %506 = vmatmul.bf16.gmra.mxu0 %v378
    %v507 = vpop.f32.mrf.mxu0
    %v508 = vadd.f32 %v403, %v507
    %v509 = vpop.f32.mrf.mxu0
    %v510 = vadd.f32 %v403, %v509
    %511 = vmatmul.bf16.gmra.mxu0 %v379
    %v512 = vpop.f32.mrf.mxu0
    %v513 = vadd.f32 %v403, %v512
    %v514 = vpop.f32.mrf.mxu0
    %v515 = vadd.f32 %v403, %v514
    %516 = vmatmul.bf16.gmra.mxu0 %v380
    %v517 = vpop.f32.mrf.mxu0
    %v518 = vadd.f32 %v403, %v517
    %v519 = vpop.f32.mrf.mxu0
    %v520 = vadd.f32 %v403, %v519
    %521 = vmatmul.bf16.gmra.mxu0 %v381
    %v522 = vpop.f32.mrf.mxu0
    %v523 = vadd.f32 %v403, %v522
    %v524 = vpop.f32.mrf.mxu0
    %v525 = vadd.f32 %v403, %v524
    %526 = vmatmul.bf16.gmra.mxu0 %v382
    %v527 = vpop.f32.mrf.mxu0
    %v528 = vadd.f32 %v403, %v527
    %v529 = vpop.f32.mrf.mxu0
    %v530 = vadd.f32 %v403, %v529
    %531 = vmatmul.bf16.gmra.mxu0 %v383
    %v532 = vpop.f32.mrf.mxu0
    %v533 = vadd.f32 %v403, %v532
    %v534 = vpop.f32.mrf.mxu0
    %v535 = vadd.f32 %v403, %v534
    %536 = vmatmul.bf16.gmra.mxu0 %v384
    %v537 = vpop.f32.mrf.mxu0
    %v538 = vadd.f32 %v403, %v537
    %v539 = vpop.f32.mrf.mxu0
    %v540 = vadd.f32 %v403, %v539
    %541 = vdwg.mxu0
    %v542 = vmax.f32 %v463, 0.0
    %v543 = vmax.f32 %v465, 0.0
    %v544 = vmax.f32 %v468, 0.0
    %v545 = vmax.f32 %v470, 0.0
    %v546 = vmax.f32 %v473, 0.0
    %v547 = vmax.f32 %v475, 0.0
    %v548 = vmax.f32 %v478, 0.0
    %v549 = vmax.f32 %v480, 0.0
    %v550 = vmax.f32 %v483, 0.0
    %v551 = vmax.f32 %v485, 0.0
    %v552 = vmax.f32 %v488, 0.0
    %v553 = vmax.f32 %v490, 0.0
    %v554 = vmax.f32 %v493, 0.0
    %v555 = vmax.f32 %v495, 0.0
    %v556 = vmax.f32 %v498, 0.0
    %v557 = vmax.f32 %v500, 0.0
    %v558 = vmax.f32 %v503, 0.0
    %v559 = vmax.f32 %v505, 0.0
    %v560 = vmax.f32 %v508, 0.0
    %v561 = vmax.f32 %v510, 0.0
    %v562 = vmax.f32 %v513, 0.0
    %v563 = vmax.f32 %v515, 0.0
    %v564 = vmax.f32 %v518, 0.0
    %v565 = vmax.f32 %v520, 0.0
    %v566 = vmax.f32 %v523, 0.0
    %v567 = vmax.f32 %v525, 0.0
    %v568 = vmax.f32 %v528, 0.0
    %v569 = vmax.f32 %v530, 0.0
    %v570 = vmax.f32 %v533, 0.0
    %v571 = vmax.f32 %v535, 0.0
    %v572 = vmax.f32 %v538, 0.0
    %v573 = vmax.f32 %v540, 0.0
    %v574 = vpack.c.bf16 %v543, %v542
    %v575 = vpack.c.bf16 %v545, %v544
    %v576 = vpack.c.bf16 %v547, %v546
    %v577 = vpack.c.bf16 %v549, %v548
    %v578 = vpack.c.bf16 %v551, %v550
    %v579 = vpack.c.bf16 %v553, %v552
    %v580 = vpack.c.bf16 %v555, %v554
    %v581 = vpack.c.bf16 %v557, %v556
    %v582 = vpack.c.bf16 %v559, %v558
    %v583 = vpack.c.bf16 %v561, %v560
    %v584 = vpack.c.bf16 %v563, %v562
    %v585 = vpack.c.bf16 %v565, %v564
    %v586 = vpack.c.bf16 %v567, %v566
    %v587 = vpack.c.bf16 %v569, %v568
    %v588 = vpack.c.bf16 %v571, %v570
    %v589 = vpack.c.bf16 %v573, %v572
    %v590 = vld [vmem:[#allocation8] sm:$0xf]
    %v591 = vld [vmem:[#allocation8 + $0x4] sm:$0xf]
    %v592 = vld [vmem:[#allocation8 + $0x8] sm:$0xf]
    %v593 = vld [vmem:[#allocation8 + $0xc] sm:$0xf]
    %v594 = vld [vmem:[#allocation8 + $0x10] sm:$0xf]
    %v595 = vld [vmem:[#allocation8 + $0x14] sm:$0xf]
    %v596 = vld [vmem:[#allocation8 + $0x18] sm:$0xf]
    %v597 = vld [vmem:[#allocation8 + $0x1c] sm:$0xf]
    %v598 = vld [vmem:[#allocation8 + $0x20] sm:$0xf]
    %v599 = vld [vmem:[#allocation8 + $0x24] sm:$0xf]
    %v600 = vld [vmem:[#allocation8 + $0x28] sm:$0xf]
    %v601 = vld [vmem:[#allocation8 + $0x2c] sm:$0xf]
    %v602 = vld [vmem:[#allocation8 + $0x30] sm:$0xf]
    %v603 = vld [vmem:[#allocation8 + $0x34] sm:$0xf]
    %v604 = vld [vmem:[#allocation8 + $0x38] sm:$0xf]
    %v605 = vld [vmem:[#allocation8 + $0x3c] sm:$0xf]
    %v606 = vld [vmem:[%s6] sm:$0x1]
    %v608 = vperm.slane %v606, 0
    %v626 = vunpack.c.l.b16 %v590
    %v627 = vunpack.c.l.b16 %v591
    %v628 = vunpack.c.l.b16 %v592
    %v629 = vunpack.c.l.b16 %v593
    %v630 = vunpack.c.l.b16 %v594
    %v631 = vunpack.c.l.b16 %v595
    %v632 = vunpack.c.l.b16 %v596
    %v633 = vunpack.c.l.b16 %v597
    %v634 = vunpack.c.l.b16 %v598
    %v635 = vunpack.c.l.b16 %v599
    %v636 = vunpack.c.l.b16 %v600
    %v637 = vunpack.c.l.b16 %v601
    %v638 = vunpack.c.l.b16 %v602
    %v639 = vunpack.c.l.b16 %v603
    %v640 = vunpack.c.l.b16 %v604
    %v641 = vunpack.c.l.b16 %v605
    %v642 = vpack.c.b16 %v627, %v626
    %v643 = vpack.c.b16 %v629, %v628
    %v644 = vpack.c.b16 %v631, %v630
    %v645 = vpack.c.b16 %v633, %v632
    %v646 = vpack.c.b16 %v635, %v634
    %v647 = vpack.c.b16 %v637, %v636
    %v648 = vpack.c.b16 %v639, %v638
    %v649 = vpack.c.b16 %v641, %v640
    %658 = vmatpush.bf16.msra.mxu0 %v649
    %659 = vmatpush.bf16.msra.mxu0 %v648
    %660 = vmatpush.bf16.msra.mxu0 %v647
    %661 = vmatpush.bf16.msra.mxu0 %v646
    %662 = vmatpush.bf16.msra.mxu0 %v645
    %663 = vmatpush.bf16.msra.mxu0 %v644
    %664 = vmatpush.bf16.msra.mxu0 %v643
    %665 = vmatpush.bf16.msra.mxu0 %v642
    %666 = vmatmul.bf16.gmra.mxu0 %v574
    %v667 = vpop.f32.mrf.mxu0
    %v668 = vadd.f32 %v608, %v667
    %v669 = vpop.f32.mrf.mxu0
    %v670 = vadd.f32 %v608, %v669
    %671 = vmatmul.bf16.gmra.mxu0 %v575
    %v672 = vpop.f32.mrf.mxu0
    %v673 = vadd.f32 %v608, %v672
    %v674 = vpop.f32.mrf.mxu0
    %v675 = vadd.f32 %v608, %v674
    %676 = vmatmul.bf16.gmra.mxu0 %v576
    %v677 = vpop.f32.mrf.mxu0
    %v678 = vadd.f32 %v608, %v677
    %v679 = vpop.f32.mrf.mxu0
    %v680 = vadd.f32 %v608, %v679
    %681 = vmatmul.bf16.gmra.mxu0 %v577
    %v682 = vpop.f32.mrf.mxu0
    %v683 = vadd.f32 %v608, %v682
    %v684 = vpop.f32.mrf.mxu0
    %v685 = vadd.f32 %v608, %v684
    %686 = vmatmul.bf16.gmra.mxu0 %v578
    %v687 = vpop.f32.mrf.mxu0
    %v688 = vadd.f32 %v608, %v687
    %v689 = vpop.f32.mrf.mxu0
    %v690 = vadd.f32 %v608, %v689
    %691 = vmatmul.bf16.gmra.mxu0 %v579
    %v692 = vpop.f32.mrf.mxu0
    %v693 = vadd.f32 %v608, %v692
    %v694 = vpop.f32.mrf.mxu0
    %v695 = vadd.f32 %v608, %v694
    %696 = vmatmul.bf16.gmra.mxu0 %v580
    %v697 = vpop.f32.mrf.mxu0
    %v698 = vadd.f32 %v608, %v697
    %v699 = vpop.f32.mrf.mxu0
    %v700 = vadd.f32 %v608, %v699
    %701 = vmatmul.bf16.gmra.mxu0 %v581
    %v702 = vpop.f32.mrf.mxu0
    %v703 = vadd.f32 %v608, %v702
    %v704 = vpop.f32.mrf.mxu0
    %v705 = vadd.f32 %v608, %v704
    %706 = vmatmul.bf16.gmra.mxu0 %v582
    %v707 = vpop.f32.mrf.mxu0
    %v708 = vadd.f32 %v608, %v707
    %v709 = vpop.f32.mrf.mxu0
    %v710 = vadd.f32 %v608, %v709
    %711 = vmatmul.bf16.gmra.mxu0 %v583
    %v712 = vpop.f32.mrf.mxu0
    %v713 = vadd.f32 %v608, %v712
    %v714 = vpop.f32.mrf.mxu0
    %v715 = vadd.f32 %v608, %v714
    %716 = vmatmul.bf16.gmra.mxu0 %v584
    %v717 = vpop.f32.mrf.mxu0
    %v718 = vadd.f32 %v608, %v717
    %v719 = vpop.f32.mrf.mxu0
    %v720 = vadd.f32 %v608, %v719
    %721 = vmatmul.bf16.gmra.mxu0 %v585
    %v722 = vpop.f32.mrf.mxu0
    %v723 = vadd.f32 %v608, %v722
    %v724 = vpop.f32.mrf.mxu0
    %v725 = vadd.f32 %v608, %v724
    %726 = vmatmul.bf16.gmra.mxu0 %v586
    %v727 = vpop.f32.mrf.mxu0
    %v728 = vadd.f32 %v608, %v727
    %v729 = vpop.f32.mrf.mxu0
    %v730 = vadd.f32 %v608, %v729
    %731 = vmatmul.bf16.gmra.mxu0 %v587
    %v732 = vpop.f32.mrf.mxu0
    %v733 = vadd.f32 %v608, %v732
    %v734 = vpop.f32.mrf.mxu0
    %v735 = vadd.f32 %v608, %v734
    %736 = vmatmul.bf16.gmra.mxu0 %v588
    %v737 = vpop.f32.mrf.mxu0
    %v738 = vadd.f32 %v608, %v737
    %v739 = vpop.f32.mrf.mxu0
    %v740 = vadd.f32 %v608, %v739
    %741 = vmatmul.bf16.gmra.mxu0 %v589
    %v742 = vpop.f32.mrf.mxu0
    %v743 = vadd.f32 %v608, %v742
    %v744 = vpop.f32.mrf.mxu0
    %v745 = vadd.f32 %v608, %v744
    %746 = vdwg.mxu0
    %747 = vxpose.xlu0.b32.start [1/16] %v668, 128
    %748 = vxpose.xlu0.b32.cont [2/16] %v670, 128
    %749 = vxpose.xlu0.b32.cont [3/16] %v673, 128
    %750 = vxpose.xlu0.b32.cont [4/16] %v675, 128
    %751 = vxpose.xlu0.b32.cont [5/16] %v678, 128
    %752 = vxpose.xlu0.b32.cont [6/16] %v680, 128
    %753 = vxpose.xlu0.b32.cont [7/16] %v683, 128
    %754 = vxpose.xlu0.b32.cont [8/16] %v685, 128
    %755 = vxpose.xlu0.b32.cont [9/16] %v688, 128
    %756 = vxpose.xlu0.b32.cont [10/16] %v690, 128
    %757 = vxpose.xlu0.b32.cont [11/16] %v693, 128
    %758 = vxpose.xlu0.b32.cont [12/16] %v695, 128
    %759 = vxpose.xlu0.b32.cont [13/16] %v698, 128
    %760 = vxpose.xlu0.b32.cont [14/16] %v700, 128
    %761 = vxpose.xlu0.b32.cont [15/16] %v703, 128
    %762 = vxpose.xlu0.b32.end [16/16] %v705, 128
    %v763 = vpop.trf.xlu0
    %v764 = vpop.trf.xlu0
    %v765 = vpop.trf.xlu0
    %v766 = vpop.trf.xlu0
    %v767 = vpop.trf.xlu0
    %v768 = vpop.trf.xlu0
    %v769 = vpop.trf.xlu0
    %v770 = vpop.trf.xlu0
    %v771 = vpop.trf.xlu0
    %v772 = vpop.trf.xlu0
    %v773 = vpop.trf.xlu0
    %v774 = vpop.trf.xlu0
    %v775 = vpop.trf.xlu0
    %v776 = vpop.trf.xlu0
    %v777 = vpop.trf.xlu0
    %v778 = vpop.trf.xlu0
    %779 = vxpose.xlu0.b32.start [1/16] %v708, 128
    %780 = vxpose.xlu0.b32.cont [2/16] %v710, 128
    %781 = vxpose.xlu0.b32.cont [3/16] %v713, 128
    %782 = vxpose.xlu0.b32.cont [4/16] %v715, 128
    %783 = vxpose.xlu0.b32.cont [5/16] %v718, 128
    %784 = vxpose.xlu0.b32.cont [6/16] %v720, 128
    %785 = vxpose.xlu0.b32.cont [7/16] %v723, 128
    %786 = vxpose.xlu0.b32.cont [8/16] %v725, 128
    %787 = vxpose.xlu0.b32.cont [9/16] %v728, 128
    %788 = vxpose.xlu0.b32.cont [10/16] %v730, 128
    %789 = vxpose.xlu0.b32.cont [11/16] %v733, 128
    %790 = vxpose.xlu0.b32.cont [12/16] %v735, 128
    %791 = vxpose.xlu0.b32.cont [13/16] %v738, 128
    %792 = vxpose.xlu0.b32.cont [14/16] %v740, 128
    %793 = vxpose.xlu0.b32.cont [15/16] %v743, 128
    %794 = vxpose.xlu0.b32.end [16/16] %v745, 128
    %v795 = vpop.trf.xlu0
    %v796 = vpop.trf.xlu0
    %v797 = vpop.trf.xlu0
    %v798 = vpop.trf.xlu0
    %v799 = vpop.trf.xlu0
    %v800 = vpop.trf.xlu0
    %v801 = vpop.trf.xlu0
    %v802 = vpop.trf.xlu0
    %v803 = vpop.trf.xlu0
    %v804 = vpop.trf.xlu0
    %v805 = vpop.trf.xlu0
    %v806 = vpop.trf.xlu0
    %v807 = vpop.trf.xlu0
    %v808 = vpop.trf.xlu0
    %v809 = vpop.trf.xlu0
    %v810 = vpop.trf.xlu0
    %vm811 = vcmask 1042432
    %v812 = vsel %vm811, %v763, -inf
    %v813 = vrot.slane %v812, 4
    %v814 = vmax.f32 %v812, %v813
    %v815 = vrot.slane %v814, 2
    %v816 = vmax.f32 %v814, %v815
    %v817 = vrot.slane %v816, 1
    %v818 = vmax.f32 %v816, %v817
    %v819 = vsel %vm811, %v795, -inf
    %v820 = vrot.slane %v819, 4
    %v821 = vmax.f32 %v819, %v820
    %v822 = vrot.slane %v821, 2
    %v823 = vmax.f32 %v821, %v822
    %v824 = vrot.slane %v823, 1
    %v825 = vmax.f32 %v823, %v824
    %v826 = vsub.f32 %v763, %v818
    %v827 = vsub.f32 %v795, %v825
    %v828 = vmul.f32 %v826, 1.442695
    %v829 = vpow.pop %v828
    %v830 = vmul.f32 %v827, 1.442695
    %v831 = vpow.pop %v830
    %v832 = vsel %vm811, %v829, 0.0
    %v833 = vrot.slane %v832, 4
    %v834 = vadd.f32 %v832, %v833
    %v835 = vrot.slane %v834, 2
    %v836 = vadd.f32 %v834, %v835
    %v837 = vrot.slane %v836, 1
    %v838 = vadd.f32 %v836, %v837
    %v839 = vsel %vm811, %v831, 0.0
    %v840 = vrot.slane %v839, 4
    %v841 = vadd.f32 %v839, %v840
    %v842 = vrot.slane %v841, 2
    %v843 = vadd.f32 %v841, %v842
    %v844 = vrot.slane %v843, 1
    %v845 = vadd.f32 %v843, %v844
    %v846 = vlog2.pop %v838
    %v847 = vmul.f32 %v846, 0.6931472
    %v848 = vlog2.pop %v845
    %v849 = vmul.f32 %v848, 0.6931472
    %v850 = vsub.f32 %v826, %v847
    %v851 = vsub.f32 %v827, %v849
    %v854 = vrot.slane %v851, 4
    %vm855 = vcmask 1043456
    %v856 = vsel %vm855, %v850, %v854
    %858 = vst [vmem:[#allocation10] sm:$0x77] %v856
    // Predicated region
    $region46: #{wizard_net_forward.1} parent=1 // pred_check
      _
    $region47: #{wizard_net_forward.1} parent=1 // pred_check_branch
      %860 = sbr.rel (0) target = $region49
    $region48: #{wizard_net_forward.1} parent=1 // pred_region
      %862 = vsyncadd [#allocation4], 64
      %s864 = sshll.u32 [#allocation10], 4
      %s865 = int_to_ptr.vmem [resolvable:$true] %s864
      %s866 = sshll.u32 %s7, 4
      %s867 = int_to_ptr.hbm [resolvable:$true] %s866
      %869 = dma.vmem_to_hbm [thread:$0]  %s865, 64, %s867, [#allocation4]
    $region49: #{wizard_net_forward.1} parent=1 // pred_fallthru
      _
    // Predicated region
    $region50: #{wizard_net_forward.1} parent=1 // pred_check
      _
    $region51: #{wizard_net_forward.1} parent=1 // pred_check_branch
      %871 = sbr.rel (0) target = $region53
    $region52: #{wizard_net_forward.1} parent=1 // pred_region
      %873 = dma.done [#allocation4], 128
    $region53: #{wizard_net_forward.1} parent=1 // pred_fallthru
      _
    %874 = vsyncpa [#allocation3], 1
    %875 = vsyncpa [#allocation6], 1
    %876 = vsyncpa [#allocation9], 1
    %877 = vsyncpa [#allocation4], 1

</llo_original>
